<compile_context>
chip_gen: v6e
topology: v6e:2x2x1
jax: 0.10.0
libtpu: 0.0.40
codegen_flags: <defaults>
</compile_context>

<pallas_src>
import functools

import jax
import jax.numpy as jnp
from jax.experimental import pallas as pl
from jax.experimental.pallas import tpu as pltpu

LANE = 128
SUBLANE = 8


def neural_net_kernel(D, uidx_ref, midx_ref, uaug_ref, maug_ref,
                      wcu_ref, wcm_ref, sc_ref, o_ref):
    """One batch tile: fused gather(+branch linear +norm), cosine-sim, head."""
    TB = o_ref.shape[1]
    UVp = uaug_ref.shape[1]
    MVp = maug_ref.shape[1]

    uidx = uidx_ref[...]                       # (1, TB) int32, batch on lanes
    midx = midx_ref[...]                       # (1, TB) int32

    # In-kernel embedding gather via one-hot matmul (exact: each one-hot
    # column selects a single bf16 row).
    # TODO(synk): for large vocabularies replace with a scalar-prefetch /
    # manual-DMA row gather (PrefetchScalarGridSpec); the one-hot path is
    # O(Vp*TB) work and keeps the whole table resident in VMEM.
    u_oh = (jax.lax.broadcasted_iota(jnp.int32, (UVp, TB), 0) == uidx
            ).astype(uaug_ref.dtype)           # (UVp, TB)
    m_oh = (jax.lax.broadcasted_iota(jnp.int32, (MVp, TB), 0) == midx
            ).astype(maug_ref.dtype)           # (MVp, TB)

    # Single augmented gather per table:
    #   rows [0:D)      -> embedding
    #   rows [D:D+16)   -> branch Linear pre-activation (W @ e + b)
    #   row  D+16       -> ||e||^2
    ua = jnp.dot(uaug_ref[...], u_oh, preferred_element_type=jnp.float32)  # (Maug, TB)
    ma = jnp.dot(maug_ref[...], m_oh, preferred_element_type=jnp.float32)  # (Maug, TB)

    u = ua[:D, :]                              # (D, TB)
    m = ma[:D, :]
    hu = jnp.maximum(ua[D:D + 16, :], 0.0)     # ReLU(user_linear(u))   (16, TB)
    hm = jnp.maximum(ma[D:D + 16, :], 0.0)     # ReLU(movie_linear(m))  (16, TB)
    un2 = ua[D + 16:D + 17, :]                 # ||u||^2                (1, TB)
    mn2 = ma[D + 16:D + 17, :]                 # ||m||^2

    # Cosine similarity along the feature (sublane) axis.
    # (Matches F.cosine_similarity up to eps handling for near-zero norms.)
    dot = jnp.sum(u * m, axis=0, keepdims=True)                 # (1, TB)
    sim = dot * jax.lax.rsqrt(jnp.maximum(un2 * mn2, 1e-16))

    # Combined Linear(33 -> 1): VPU multiply + sublane reduces (no N=1 MXU
    # matmul); scalar tail (similarity weight, bias) read from SMEM.
    wcs = sc_ref[0]
    bc = sc_ref[1]
    logit = (jnp.sum(hu * wcu_ref[...], axis=0, keepdims=True)
             + jnp.sum(hm * wcm_ref[...], axis=0, keepdims=True)
             + sim * wcs + bc)

    o_ref[...] = jax.nn.sigmoid(logit) * 5.0 + 0.25             # (1, TB) lane-dense


def neural_net_forward(user_idx, movie_idx, params, *, tb=1024):
    """Pads the batch, runs the gridded kernel, returns shape (B,) float32."""
    B = user_idx.shape[0]
    tb = max(LANE, (tb // LANE) * LANE)

    # Lane-multiple batch tile.  Whenever the padded batch allows it, pick TB
    # so the grid has >= 2 steps (shards across both v7x TensorCores).
    Bp0 = pl.cdiv(B, LANE) * LANE
    if Bp0 <= LANE:
        TB = LANE
    else:
        TB = min(tb, pl.cdiv(Bp0, 2 * LANE) * LANE)
    Bp = pl.cdiv(Bp0, TB) * TB

    uidx = jnp.pad(user_idx.astype(jnp.int32), (0, Bp - B)).reshape(1, Bp)
    midx = jnp.pad(movie_idx.astype(jnp.int32), (0, Bp - B)).reshape(1, Bp)

    uaug = params["user_aug_t"]        # (Maug, UVp) bf16
    maug = params["movie_aug_t"]       # (Maug, MVp) bf16
    D = params["embed_dim"]
    Maug, UVp = uaug.shape
    _, MVp = maug.shape

    # NOTE: the constant-index blocks (aug tables, head columns) total only a
    # few tens of KB at these vocab sizes, so default double-buffering fits
    # every generation's VMEM (incl. v7x's 64 MiB).  If the vocabularies grow,
    # single-buffer them (pl.Buffered(1) / pl.ANY + manual copy) and raise
    # vmem_limit_bytes.
    out = pl.pallas_call(
        functools.partial(neural_net_kernel, D),
        out_shape=jax.ShapeDtypeStruct((1, Bp), jnp.float32),
        grid=(Bp // TB,),
        in_specs=[
            pl.BlockSpec((1, TB), lambda i: (0, i)),            # user indices
            pl.BlockSpec((1, TB), lambda i: (0, i)),            # movie indices
            pl.BlockSpec((Maug, UVp), lambda i: (0, 0)),        # user aug table (bf16)
            pl.BlockSpec((Maug, MVp), lambda i: (0, 0)),        # movie aug table (bf16)
            pl.BlockSpec((16, 1), lambda i: (0, 0)),            # head col (user half)
            pl.BlockSpec((16, 1), lambda i: (0, 0)),            # head col (movie half)
            pl.BlockSpec(memory_space=pltpu.MemorySpace.SMEM),  # [sim weight, bias]
        ],
        out_specs=pl.BlockSpec((1, TB), lambda i: (0, i)),      # lane-dense output
        compiler_params=pltpu.CompilerParams(
            dimension_semantics=("parallel",)),
    )(uidx, midx, uaug, maug, params["wc_u"], params["wc_m"], params["scalars"])

    return out[0, :B]     # torch.reshape(out, (-1,))


def neural_net_reference(user_idx, movie_idx, params):
    """Pure-JAX reference using the SAME packed bf16 tables as the kernel."""
    D = params["embed_dim"]
    ua = params["user_aug_t"][:, user_idx].astype(jnp.float32)    # (Maug, B)
    ma = params["movie_aug_t"][:, movie_idx].astype(jnp.float32)
    u, m = ua[:D], ma[:D]
    hu = jnp.maximum(ua[D:D + 16], 0.0)
    hm = jnp.maximum(ma[D:D + 16], 0.0)
    un2, mn2 = ua[D + 16], ma[D + 16]
    dot = jnp.sum(u * m, axis=0)
    sim = dot * jax.lax.rsqrt(jnp.maximum(un2 * mn2, 1e-16))
    logit = (jnp.sum(hu * params["wc_u"], axis=0)
             + jnp.sum(hm * params["wc_m"], axis=0)
             + sim * params["scalars"][0] + params["scalars"][1])
    return jax.nn.sigmoid(logit) * 5.0 + 0.25


def neural_net_reference_f32(user_idx, movie_idx, params):
    """Full-precision reference mirroring the PyTorch module (f32 weights)."""
    p = params["f32"]
    u = p["user_embeds"][user_idx]                                # (B, D)
    m = p["movie_embeds"][movie_idx]
    un = jnp.sqrt(jnp.sum(u * u, axis=-1))
    mn = jnp.sqrt(jnp.sum(m * m, axis=-1))
    sim = jnp.sum(u * m, axis=-1) / (jnp.maximum(un, 1e-8) * jnp.maximum(mn, 1e-8))
    hu = jnp.maximum(u @ p["wu"].T + p["bu"], 0.0)
    hm = jnp.maximum(m @ p["wm"].T + p["bm"], 0.0)
    x = jnp.concatenate([hu, hm, sim[:, None]], axis=1)           # (B, 33)
    logit = (x @ p["wc"].T + p["bc"])[:, 0]
    return jax.nn.sigmoid(logit) * 5.0 + 0.25


def init_params(key, user_vocab_size, movie_vocab_size, embedding_dim):
    """PyTorch-style init, then pack into kernel-ready augmented layouts."""
    ks = jax.random.split(key, 8)
    D = embedding_dim

    def uniform(k, shape, fan_in):
        bound = 1.0 / float(fan_in) ** 0.5
        return jax.random.uniform(k, shape, jnp.float32, -bound, bound)

    # nn.Embedding ~ N(0,1); nn.Linear ~ U(-1/sqrt(fan_in), 1/sqrt(fan_in))
    user_embeds = jax.random.normal(ks[0], (user_vocab_size, D), jnp.float32)
    movie_embeds = jax.random.normal(ks[1], (movie_vocab_size, D), jnp.float32)
    wu = uniform(ks[2], (16, D), D)      # user_linear.weight  (PyTorch layout)
    bu = uniform(ks[3], (16,), D)
    wm = uniform(ks[4], (16, D), D)      # movie_linear.weight
    bm = uniform(ks[5], (16,), D)
    wc = uniform(ks[6], (1, 33), 33)     # combined_linear.weight
    bc = uniform(ks[7], (1,), 33)

    Maug = pl.cdiv(D + 17, SUBLANE) * SUBLANE

    def pack_aug(embeds, w, b):
        # Augmented, transposed, bf16 table: [E^T ; W@E^T + b ; ||e||^2],
        # vocab padded to a lane multiple, rows padded to a sublane multiple.
        # The bias / norm folds are exact under the one-hot gather (each
        # one-hot column sums to 1).
        V = embeds.shape[0]
        Vp = pl.cdiv(V, LANE) * LANE
        et = embeds.T                                        # (D, V)
        pre = w @ et + b[:, None]                            # (16, V)
        nrm = jnp.sum(et * et, axis=0, keepdims=True)        # (1, V)
        aug = jnp.concatenate([et, pre, nrm], axis=0)        # (D+17, V)
        out = jnp.zeros((Maug, Vp), jnp.bfloat16)
        return out.at[:D + 17, :V].set(aug.astype(jnp.bfloat16))

    return dict(
        embed_dim=D,
        user_aug_t=pack_aug(user_embeds, wu, bu),
        movie_aug_t=pack_aug(movie_embeds, wm, bm),
        wc_u=wc[0, :16].reshape(16, 1),
        wc_m=wc[0, 16:32].reshape(16, 1),
        scalars=jnp.array([wc[0, 32], bc[0]], jnp.float32),
        f32=dict(user_embeds=user_embeds, movie_embeds=movie_embeds,
                 wu=wu, bu=bu, wm=wm, bm=bm, wc=wc, bc=bc),
    )


if __name__ == "__main__":
    USER_VOCAB = 50
    MOVIE_VOCAB = 60
    EMBED_DIM = 32
    BATCH = 8
    # TODO(synk): dropout is treated as identity (eval mode); training-mode
    # dropout is not implemented.

    key = jax.random.PRNGKey(0)
    pkey, ukey, mkey = jax.random.split(key, 3)

    params = init_params(pkey, USER_VOCAB, MOVIE_VOCAB, EMBED_DIM)
    user_idx = jax.random.randint(ukey, (BATCH,), 0, USER_VOCAB, dtype=jnp.int32)
    movie_idx = jax.random.randint(mkey, (BATCH,), 0, MOVIE_VOCAB, dtype=jnp.int32)

    out = neural_net_forward(user_idx, movie_idx, params)
    out = jax.block_until_ready(out)

    ref = neural_net_reference(user_idx, movie_idx, params)          # same packed bf16 tables
    ref_f32 = neural_net_reference_f32(user_idx, movie_idx, params)  # original f32 module math

    assert out.shape == (BATCH,)
    assert bool(jnp.all(jnp.isfinite(out)))
    assert bool(jnp.all((out >= 0.25) & (out <= 5.25)))      # sigmoid*5 + 0.25 range
    assert float(jnp.max(jnp.abs(out - ref))) < 1e-4, "mismatch vs packed-precision reference"
    assert float(jnp.max(jnp.abs(out - ref_f32))) < 1e-1, "mismatch vs f32 module reference"
    print("KERNEL_OK")
</pallas_src>

<mosaic_0001>
module attributes {stable_mosaic.version = 11 : i64} {
  func.func @neural_net_kernel(%arg0: i32, %arg1: memref<1x128xi32, #tpu.memory_space<vmem>>, %arg2: memref<1x128xi32, #tpu.memory_space<vmem>>, %arg3: memref<56x128xbf16, #tpu.memory_space<vmem>>, %arg4: memref<56x128xbf16, #tpu.memory_space<vmem>>, %arg5: memref<16x1xf32, #tpu.memory_space<vmem>>, %arg6: memref<16x1xf32, #tpu.memory_space<vmem>>, %arg7: memref<2xf32, #tpu.memory_space<smem>>, %arg8: memref<1x128xf32, #tpu.memory_space<vmem>>) attributes {dimension_semantics = [#tpu.dimension_semantics<parallel>], iteration_bounds = array<i64: 1>, scalar_prefetch = 0 : i64, scratch_operands = 0 : i64, tpu.core_type = #tpu.core_type<tc>, window_params = [{transform_indices = @transform_0, window_bounds = array<i64: 1, 128>}, {transform_indices = @transform_1, window_bounds = array<i64: 1, 128>}, {pipeline_mode = #tpu.pipeline_mode<synchronous>, transform_indices = @transform_2, window_bounds = array<i64: 56, 128>}, {pipeline_mode = #tpu.pipeline_mode<synchronous>, transform_indices = @transform_3, window_bounds = array<i64: 56, 128>}, {pipeline_mode = #tpu.pipeline_mode<synchronous>, transform_indices = @transform_4, window_bounds = array<i64: 16, 1>}, {pipeline_mode = #tpu.pipeline_mode<synchronous>, transform_indices = @transform_5, window_bounds = array<i64: 16, 1>}, {transform_indices = @transform_6, window_bounds = array<i64: 2>}, {transform_indices = @transform_7, window_bounds = array<i64: 1, 128>}]} {
    %c0 = arith.constant 0 : index
    %c0_0 = arith.constant 0 : index
    %0 = vector.load %arg1[%c0, %c0_0] : memref<1x128xi32, #tpu.memory_space<vmem>>, vector<1x128xi32>
    %c0_1 = arith.constant 0 : index
    %c0_2 = arith.constant 0 : index
    %1 = vector.load %arg2[%c0_1, %c0_2] : memref<1x128xi32, #tpu.memory_space<vmem>>, vector<1x128xi32>
    %2 = tpu.iota {dimensions = array<i32: 0>} : vector<128x128xi32>
    %3 = vector.broadcast %0 : vector<1x128xi32> to vector<128x128xi32>
    %4 = arith.cmpi eq, %2, %3 : vector<128x128xi32>
    %5 = arith.extui %4 : vector<128x128xi1> to vector<128x128xi32>
    %6 = arith.sitofp %5 : vector<128x128xi32> to vector<128x128xf32>
    %7 = arith.truncf %6 : vector<128x128xf32> to vector<128x128xbf16>
    %8 = tpu.iota {dimensions = array<i32: 0>} : vector<128x128xi32>
    %9 = vector.broadcast %1 : vector<1x128xi32> to vector<128x128xi32>
    %10 = arith.cmpi eq, %8, %9 : vector<128x128xi32>
    %11 = arith.extui %10 : vector<128x128xi1> to vector<128x128xi32>
    %12 = arith.sitofp %11 : vector<128x128xi32> to vector<128x128xf32>
    %13 = arith.truncf %12 : vector<128x128xf32> to vector<128x128xbf16>
    %c0_3 = arith.constant 0 : index
    %c0_4 = arith.constant 0 : index
    %14 = vector.load %arg3[%c0_3, %c0_4] : memref<56x128xbf16, #tpu.memory_space<vmem>>, vector<56x128xbf16>
    %cst = arith.constant dense<0.000000e+00> : vector<56x128xf32>
    %15 = tpu.matmul %14, %7, %cst {dimension_numbers = #tpu.dot_dimension_numbers<[1], [0], [0], [1], [0, 0, 1, 1], [], []>} : vector<56x128xbf16>, vector<128x128xbf16>, vector<56x128xf32> -> vector<56x128xf32>
    %c0_5 = arith.constant 0 : index
    %c0_6 = arith.constant 0 : index
    %16 = vector.load %arg4[%c0_5, %c0_6] : memref<56x128xbf16, #tpu.memory_space<vmem>>, vector<56x128xbf16>
    %cst_7 = arith.constant dense<0.000000e+00> : vector<56x128xf32>
    %17 = tpu.matmul %16, %13, %cst_7 {dimension_numbers = #tpu.dot_dimension_numbers<[1], [0], [0], [1], [0, 0, 1, 1], [], []>} : vector<56x128xbf16>, vector<128x128xbf16>, vector<56x128xf32> -> vector<56x128xf32>
    %18 = vector.extract_strided_slice %15 {offsets = [0, 0], sizes = [32, 128], strides = [1, 1]} : vector<56x128xf32> to vector<32x128xf32>
    %19 = vector.extract_strided_slice %17 {offsets = [0, 0], sizes = [32, 128], strides = [1, 1]} : vector<56x128xf32> to vector<32x128xf32>
    %20 = vector.extract_strided_slice %15 {offsets = [32, 0], sizes = [16, 128], strides = [1, 1]} : vector<56x128xf32> to vector<16x128xf32>
    %cst_8 = arith.constant 0.000000e+00 : f32
    %21 = vector.broadcast %cst_8 : f32 to vector<16x128xf32>
    %22 = arith.maximumf %20, %21 : vector<16x128xf32>
    %23 = vector.extract_strided_slice %17 {offsets = [32, 0], sizes = [16, 128], strides = [1, 1]} : vector<56x128xf32> to vector<16x128xf32>
    %cst_9 = arith.constant 0.000000e+00 : f32
    %24 = vector.broadcast %cst_9 : f32 to vector<16x128xf32>
    %25 = arith.maximumf %23, %24 : vector<16x128xf32>
    %26 = vector.extract_strided_slice %15 {offsets = [48, 0], sizes = [1, 128], strides = [1, 1]} : vector<56x128xf32> to vector<1x128xf32>
    %27 = vector.extract_strided_slice %17 {offsets = [48, 0], sizes = [1, 128], strides = [1, 1]} : vector<56x128xf32> to vector<1x128xf32>
    %28 = arith.mulf %18, %19 : vector<32x128xf32>
    %cst_10 = arith.constant dense<0.000000e+00> : vector<128xf32>
    %29 = vector.multi_reduction <add>, %28, %cst_10 [0] : vector<32x128xf32> to vector<128xf32>
    %30 = vector.shape_cast %29 : vector<128xf32> to vector<1x128xf32>
    %31 = arith.mulf %26, %27 : vector<1x128xf32>
    %cst_11 = arith.constant 1.000000e-16 : f32
    %32 = vector.broadcast %cst_11 : f32 to vector<1x128xf32>
    %33 = arith.maximumf %31, %32 : vector<1x128xf32>
    %34 = math.rsqrt %33 : vector<1x128xf32>
    %35 = arith.mulf %30, %34 : vector<1x128xf32>
    %c0_12 = arith.constant 0 : index
    %36 = memref.load %arg7[%c0_12] : memref<2xf32, #tpu.memory_space<smem>>
    %c1 = arith.constant 1 : index
    %37 = memref.load %arg7[%c1] : memref<2xf32, #tpu.memory_space<smem>>
    %c0_13 = arith.constant 0 : index
    %c0_14 = arith.constant 0 : index
    %38 = vector.load %arg5[%c0_13, %c0_14] : memref<16x1xf32, #tpu.memory_space<vmem>>, vector<16x1xf32>
    %39 = vector.broadcast %38 : vector<16x1xf32> to vector<16x128xf32>
    %40 = arith.mulf %22, %39 : vector<16x128xf32>
    %cst_15 = arith.constant dense<0.000000e+00> : vector<128xf32>
    %41 = vector.multi_reduction <add>, %40, %cst_15 [0] : vector<16x128xf32> to vector<128xf32>
    %42 = vector.shape_cast %41 : vector<128xf32> to vector<1x128xf32>
    %c0_16 = arith.constant 0 : index
    %c0_17 = arith.constant 0 : index
    %43 = vector.load %arg6[%c0_16, %c0_17] : memref<16x1xf32, #tpu.memory_space<vmem>>, vector<16x1xf32>
    %44 = vector.broadcast %43 : vector<16x1xf32> to vector<16x128xf32>
    %45 = arith.mulf %25, %44 : vector<16x128xf32>
    %cst_18 = arith.constant dense<0.000000e+00> : vector<128xf32>
    %46 = vector.multi_reduction <add>, %45, %cst_18 [0] : vector<16x128xf32> to vector<128xf32>
    %47 = vector.shape_cast %46 : vector<128xf32> to vector<1x128xf32>
    %48 = arith.addf %42, %47 : vector<1x128xf32>
    %49 = vector.broadcast %36 : f32 to vector<1x128xf32>
    %50 = arith.mulf %35, %49 : vector<1x128xf32>
    %51 = arith.addf %48, %50 : vector<1x128xf32>
    %52 = vector.broadcast %37 : f32 to vector<1x128xf32>
    %53 = arith.addf %51, %52 : vector<1x128xf32>
    %54 = arith.negf %53 : vector<1x128xf32>
    %55 = math.exp %54 : vector<1x128xf32>
    %cst_19 = arith.constant 1.000000e+00 : f32
    %56 = vector.broadcast %cst_19 : f32 to vector<1x128xf32>
    %57 = arith.addf %56, %55 : vector<1x128xf32>
    %58 = arith.divf %56, %57 : vector<1x128xf32>
    %cst_20 = arith.constant 5.000000e+00 : f32
    %59 = vector.broadcast %cst_20 : f32 to vector<1x128xf32>
    %60 = arith.mulf %58, %59 : vector<1x128xf32>
    %cst_21 = arith.constant 2.500000e-01 : f32
    %61 = vector.broadcast %cst_21 : f32 to vector<1x128xf32>
    %62 = arith.addf %60, %61 : vector<1x128xf32>
    %c0_22 = arith.constant 0 : index
    %c0_23 = arith.constant 0 : index
    %63 = vector.load %arg8[%c0_22, %c0_23] : memref<1x128xf32, #tpu.memory_space<vmem>>, vector<1x128xf32>
    tpu.vector_store %arg8[%c0_22, %c0_23], %62 {strides = array<i32>} : memref<1x128xf32, #tpu.memory_space<vmem>>, vector<1x128xf32>,
    return
  }
  func.func @transform_0(%arg0: i32) -> (i32, i32) {
    %c0_i32 = arith.constant 0 : i32
    %c0_i32_0 = arith.constant 0 : i32
    return %c0_i32, %arg0 : i32, i32
  }
  func.func @transform_1(%arg0: i32) -> (i32, i32) {
    %c0_i32 = arith.constant 0 : i32
    %c0_i32_0 = arith.constant 0 : i32
    return %c0_i32, %arg0 : i32, i32
  }
  func.func @transform_2(%arg0: i32) -> (i32, i32) {
    %c0_i32 = arith.constant 0 : i32
    %c0_i32_0 = arith.constant 0 : i32
    %c0_i32_1 = arith.constant 0 : i32
    return %c0_i32, %c0_i32_0 : i32, i32
  }
  func.func @transform_3(%arg0: i32) -> (i32, i32) {
    %c0_i32 = arith.constant 0 : i32
    %c0_i32_0 = arith.constant 0 : i32
    %c0_i32_1 = arith.constant 0 : i32
    return %c0_i32, %c0_i32_0 : i32, i32
  }
  func.func @transform_4(%arg0: i32) -> (i32, i32) {
    %c0_i32 = arith.constant 0 : i32
    %c0_i32_0 = arith.constant 0 : i32
    %c0_i32_1 = arith.constant 0 : i32
    return %c0_i32, %c0_i32_0 : i32, i32
  }
  func.func @transform_5(%arg0: i32) -> (i32, i32) {
    %c0_i32 = arith.constant 0 : i32
    %c0_i32_0 = arith.constant 0 : i32
    %c0_i32_1 = arith.constant 0 : i32
    return %c0_i32, %c0_i32_0 : i32, i32
  }
  func.func @transform_6(%arg0: i32) -> i32 {
    %c0_i32 = arith.constant 0 : i32
    %c0_i32_0 = arith.constant 0 : i32
    return %c0_i32 : i32
  }
  func.func @transform_7(%arg0: i32) -> (i32, i32) {
    %c0_i32 = arith.constant 0 : i32
    %c0_i32_0 = arith.constant 0 : i32
    return %c0_i32, %arg0 : i32, i32
  }
}

</mosaic_0001>

<llo_original>
// kernel: tpu_custom_call.1
$region0: #{tpu_custom_call.1}
  #allocation0 [shape = 'u32[]', space=smem, size = 0x4, offset = 0x4, fixed_abs, tag = 'smem constant byte address 0x4 - core index']
  #allocation1 [shape = 'u32[144,128]{1,0:T(1,128)}', space=vmem, size = 0x12000, scoped, tag = 'internal scratch']
  %s0 = inlined_call_operand.vmem [shape: s32[1,128], index: 0, kind: input, shape index: {}]
  %s1 = inlined_call_operand.vmem [shape: s32[1,128], index: 1, kind: input, shape index: {}]
  %s2 = inlined_call_operand.vmem [shape: bf16[56,128], index: 2, kind: input, shape index: {}]
  %s3 = inlined_call_operand.hbm [shape: bf16[56,128], index: 3, kind: input, shape index: {}]
  %s4 = inlined_call_operand.vmem [shape: f32[16,1], index: 4, kind: input, shape index: {}]
  %s5 = inlined_call_operand.vmem [shape: f32[16,1], index: 5, kind: input, shape index: {}]
  %s6 = inlined_call_operand.vmem [shape: f32[2], index: 6, kind: input, shape index: {}]
  %s7 = inlined_call_operand.hbm [shape: f32[1,128], index: 7, kind: output, shape index: {}]
  %s8 = sld [smem:[#allocation0]]
  $region46: #{tpu_custom_call.1} parent=0
    _
  %s10 = ssub.s32 1, %s8
  %s11 = scalar_select 0, %s10, %s8
  $region1: #{tpu_custom_call.1} parent=0
    #allocation2 [shape = 'u8[14336]{0}', space=vmem, size = 0x3800, scoped, tag = 'input window, operand 3, single buffered']
    #allocation3 [shape = 's32[1]{0}', space=sflag, size = 0x4, scoped, tag = 'scoped memory for tpu_custom_call.1']
    #allocation4 [shape = 's32[1]{0}', space=sflag, size = 0x4, scoped, tag = 'scoped memory for tpu_custom_call.1']
    #allocation5 [shape = 's32[1]{0}', space=sflag, size = 0x4, scoped, tag = 'scoped memory for tpu_custom_call.1']
    #allocation6 [shape = 'u8[512]{0}', space=smem, size = 0x200, scoped, tag = 'input window, operand 6, single buffered']
    #allocation7 [shape = 'u8[512]{0}', space=vmem, size = 0x400, scoped, tag = 'output window, operand 0, single buffered']
    %12 = vsyncpa [#allocation3], 0
    %13 = vsyncpa [#allocation5], 0
    %14 = vsyncpa [#allocation4], 0
    // Predicated region
    $region2: #{tpu_custom_call.1} parent=1 // pred_check
      _
    $region3: #{tpu_custom_call.1} parent=1 // pred_check_branch
      %16 = sbr.rel (0) target = $region5
    $region4: #{tpu_custom_call.1} parent=1 // pred_region
      _
    $region5: #{tpu_custom_call.1} parent=1 // pred_fallthru
      _
    // Predicated region
    $region6: #{tpu_custom_call.1} parent=1 // pred_check
      _
    $region7: #{tpu_custom_call.1} parent=1 // pred_check_branch
      %18 = sbr.rel (0) target = $region9
    $region8: #{tpu_custom_call.1} parent=1 // pred_region
      _
    $region9: #{tpu_custom_call.1} parent=1 // pred_fallthru
      _
    // Predicated region
    $region10: #{tpu_custom_call.1} parent=1 // pred_check
      _
    $region11: #{tpu_custom_call.1} parent=1 // pred_check_branch
      %20 = sbr.rel (0) target = $region13
    $region12: #{tpu_custom_call.1} parent=1 // pred_region
      _
    $region13: #{tpu_custom_call.1} parent=1 // pred_fallthru
      _
    // Predicated region
    $region14: #{tpu_custom_call.1} parent=1 // pred_check
      _
    $region15: #{tpu_custom_call.1} parent=1 // pred_check_branch
      %22 = sbr.rel (0) target = $region17
    $region16: #{tpu_custom_call.1} parent=1 // pred_region
      %s24 = ssub.s32 448, 448
      %25 = vsyncadd [#allocation3], %s24
      %s26 = sshll.u32 [#allocation2], 4
      %s27 = int_to_ptr.vmem [resolvable:$true] %s26
      %32 = dma.hbm_to_vmem [thread:$0]  %s3, 448, %s27, [#allocation3], 64, 64, 4
    $region17: #{tpu_custom_call.1} parent=1 // pred_fallthru
      _
    // Predicated region
    $region18: #{tpu_custom_call.1} parent=1 // pred_check
      _
    $region19: #{tpu_custom_call.1} parent=1 // pred_check_branch
      %34 = sbr.rel (0) target = $region21
    $region20: #{tpu_custom_call.1} parent=1 // pred_region
      _
    $region21: #{tpu_custom_call.1} parent=1 // pred_fallthru
      _
    // Predicated region
    $region22: #{tpu_custom_call.1} parent=1 // pred_check
      _
    $region23: #{tpu_custom_call.1} parent=1 // pred_check_branch
      %36 = sbr.rel (0) target = $region25
    $region24: #{tpu_custom_call.1} parent=1 // pred_region
      _
    $region25: #{tpu_custom_call.1} parent=1 // pred_fallthru
      _
    // Predicated region
    $region26: #{tpu_custom_call.1} parent=1 // pred_check
      _
    $region27: #{tpu_custom_call.1} parent=1 // pred_check_branch
      %38 = sbr.rel (0) target = $region29
    $region28: #{tpu_custom_call.1} parent=1 // pred_region
      %s40 = ssub.s32 16, 16
      %41 = vsyncadd [#allocation5], %s40
      %s43 = sshll.u32 %s6, 4
      %s44 = int_to_ptr.vmem [resolvable:$true] %s43
      %46 = dma.vmem_to_smem %s44, 16, [#allocation6], [#allocation5]
    $region29: #{tpu_custom_call.1} parent=1 // pred_fallthru
      _
    // Predicated region
    $region30: #{tpu_custom_call.1} parent=1 // pred_check
      _
    $region31: #{tpu_custom_call.1} parent=1 // pred_check_branch
      %48 = sbr.rel (0) target = $region33
    $region32: #{tpu_custom_call.1} parent=1 // pred_region
      %49 = dma.done [#allocation3], 448
    $region33: #{tpu_custom_call.1} parent=1 // pred_fallthru
      _
    // Predicated region
    $region34: #{tpu_custom_call.1} parent=1 // pred_check
      _
    $region35: #{tpu_custom_call.1} parent=1 // pred_check_branch
      %51 = sbr.rel (0) target = $region37
    $region36: #{tpu_custom_call.1} parent=1 // pred_region
      %52 = dma.done [#allocation5], 16
    $region37: #{tpu_custom_call.1} parent=1 // pred_fallthru
      _
    %53 = sfence
    %v55 = vld [vmem:[%s0] sm:$0x1]
    %v56 = vld [vmem:[%s1] sm:$0x1]
    %v57 = vlaneseq
    %v58 = vshrl.u32 %v57, 7
    %v59 = vadd.s32 %v58, 8
    %v60 = vadd.s32 %v58, 16
    %v61 = vadd.s32 %v58, 24
    %v62 = vadd.s32 %v58, 32
    %v63 = vadd.s32 %v58, 40
    %v64 = vadd.s32 %v58, 48
    %v65 = vadd.s32 %v58, 56
    %v66 = vadd.s32 %v58, 64
    %v67 = vadd.s32 %v58, 72
    %v68 = vadd.s32 %v58, 80
    %v69 = vadd.s32 %v58, 88
    %v70 = vadd.s32 %v58, 96
    %v71 = vadd.s32 %v58, 104
    %v72 = vadd.s32 %v58, 112
    %v73 = vadd.s32 %v58, 120
    %v74 = vlaneseq
    %v75 = vshrl.u32 %v74, 7
    %v76 = vsub.s32 0, %v75
    %v77 = vrot.slane %v55, %v76
    %vm78 = vcmp.eq.s32.totalorder %v58, %v77
    %vm79 = vcmp.eq.s32.totalorder %v59, %v77
    %vm80 = vcmp.eq.s32.totalorder %v60, %v77
    %vm81 = vcmp.eq.s32.totalorder %v61, %v77
    %vm82 = vcmp.eq.s32.totalorder %v62, %v77
    %vm83 = vcmp.eq.s32.totalorder %v63, %v77
    %vm84 = vcmp.eq.s32.totalorder %v64, %v77
    %vm85 = vcmp.eq.s32.totalorder %v65, %v77
    %vm86 = vcmp.eq.s32.totalorder %v66, %v77
    %vm87 = vcmp.eq.s32.totalorder %v67, %v77
    %vm88 = vcmp.eq.s32.totalorder %v68, %v77
    %vm89 = vcmp.eq.s32.totalorder %v69, %v77
    %vm90 = vcmp.eq.s32.totalorder %v70, %v77
    %vm91 = vcmp.eq.s32.totalorder %v71, %v77
    %vm92 = vcmp.eq.s32.totalorder %v72, %v77
    %vm93 = vcmp.eq.s32.totalorder %v73, %v77
    %v94 = vsel %vm78, 1, 0
    %v95 = vsel %vm79, 1, 0
    %v96 = vsel %vm80, 1, 0
    %v97 = vsel %vm81, 1, 0
    %v98 = vsel %vm82, 1, 0
    %v99 = vsel %vm83, 1, 0
    %v100 = vsel %vm84, 1, 0
    %v101 = vsel %vm85, 1, 0
    %v102 = vsel %vm86, 1, 0
    %v103 = vsel %vm87, 1, 0
    %v104 = vsel %vm88, 1, 0
    %v105 = vsel %vm89, 1, 0
    %v106 = vsel %vm90, 1, 0
    %v107 = vsel %vm91, 1, 0
    %v108 = vsel %vm92, 1, 0
    %v109 = vsel %vm93, 1, 0
    %v110 = vcvt.s32.f32 %v94
    %v111 = vcvt.s32.f32 %v95
    %v112 = vcvt.s32.f32 %v96
    %v113 = vcvt.s32.f32 %v97
    %v114 = vcvt.s32.f32 %v98
    %v115 = vcvt.s32.f32 %v99
    %v116 = vcvt.s32.f32 %v100
    %v117 = vcvt.s32.f32 %v101
    %v118 = vcvt.s32.f32 %v102
    %v119 = vcvt.s32.f32 %v103
    %v120 = vcvt.s32.f32 %v104
    %v121 = vcvt.s32.f32 %v105
    %v122 = vcvt.s32.f32 %v106
    %v123 = vcvt.s32.f32 %v107
    %v124 = vcvt.s32.f32 %v108
    %v125 = vcvt.s32.f32 %v109
    %v126 = vpack.c.bf16 %v111, %v110
    %v127 = vpack.c.bf16 %v113, %v112
    %v128 = vpack.c.bf16 %v115, %v114
    %v129 = vpack.c.bf16 %v117, %v116
    %v130 = vpack.c.bf16 %v119, %v118
    %v131 = vpack.c.bf16 %v121, %v120
    %v132 = vpack.c.bf16 %v123, %v122
    %v133 = vpack.c.bf16 %v125, %v124
    %v134 = vlaneseq
    %v135 = vshrl.u32 %v134, 7
    %v136 = vsub.s32 0, %v135
    %v137 = vrot.slane %v56, %v136
    %vm138 = vcmp.eq.s32.totalorder %v58, %v137
    %vm139 = vcmp.eq.s32.totalorder %v59, %v137
    %vm140 = vcmp.eq.s32.totalorder %v60, %v137
    %vm141 = vcmp.eq.s32.totalorder %v61, %v137
    %vm142 = vcmp.eq.s32.totalorder %v62, %v137
    %vm143 = vcmp.eq.s32.totalorder %v63, %v137
    %vm144 = vcmp.eq.s32.totalorder %v64, %v137
    %vm145 = vcmp.eq.s32.totalorder %v65, %v137
    %vm146 = vcmp.eq.s32.totalorder %v66, %v137
    %vm147 = vcmp.eq.s32.totalorder %v67, %v137
    %vm148 = vcmp.eq.s32.totalorder %v68, %v137
    %vm149 = vcmp.eq.s32.totalorder %v69, %v137
    %vm150 = vcmp.eq.s32.totalorder %v70, %v137
    %vm151 = vcmp.eq.s32.totalorder %v71, %v137
    %vm152 = vcmp.eq.s32.totalorder %v72, %v137
    %vm153 = vcmp.eq.s32.totalorder %v73, %v137
    %v154 = vsel %vm138, 1, 0
    %v155 = vsel %vm139, 1, 0
    %v156 = vsel %vm140, 1, 0
    %v157 = vsel %vm141, 1, 0
    %v158 = vsel %vm142, 1, 0
    %v159 = vsel %vm143, 1, 0
    %v160 = vsel %vm144, 1, 0
    %v161 = vsel %vm145, 1, 0
    %v162 = vsel %vm146, 1, 0
    %v163 = vsel %vm147, 1, 0
    %v164 = vsel %vm148, 1, 0
    %v165 = vsel %vm149, 1, 0
    %v166 = vsel %vm150, 1, 0
    %v167 = vsel %vm151, 1, 0
    %v168 = vsel %vm152, 1, 0
    %v169 = vsel %vm153, 1, 0
    %v170 = vcvt.s32.f32 %v154
    %v171 = vcvt.s32.f32 %v155
    %v172 = vcvt.s32.f32 %v156
    %v173 = vcvt.s32.f32 %v157
    %v174 = vcvt.s32.f32 %v158
    %v175 = vcvt.s32.f32 %v159
    %v176 = vcvt.s32.f32 %v160
    %v177 = vcvt.s32.f32 %v161
    %v178 = vcvt.s32.f32 %v162
    %v179 = vcvt.s32.f32 %v163
    %v180 = vcvt.s32.f32 %v164
    %v181 = vcvt.s32.f32 %v165
    %v182 = vcvt.s32.f32 %v166
    %v183 = vcvt.s32.f32 %v167
    %v184 = vcvt.s32.f32 %v168
    %v185 = vcvt.s32.f32 %v169
    %v186 = vpack.c.bf16 %v171, %v170
    %v187 = vpack.c.bf16 %v173, %v172
    %v188 = vpack.c.bf16 %v175, %v174
    %v189 = vpack.c.bf16 %v177, %v176
    %v190 = vpack.c.bf16 %v179, %v178
    %v191 = vpack.c.bf16 %v181, %v180
    %v192 = vpack.c.bf16 %v183, %v182
    %v193 = vpack.c.bf16 %v185, %v184
    %v194 = vld [vmem:[%s2] sm:$0xf]
    %v195 = vld [vmem:[%s2 + $0x4] sm:$0xf]
    %v196 = vld [vmem:[%s2 + $0x8] sm:$0xf]
    %v197 = vld [vmem:[%s2 + $0xc] sm:$0xf]
    %v198 = vld [vmem:[%s2 + $0x10] sm:$0xf]
    %v199 = vld [vmem:[%s2 + $0x14] sm:$0xf]
    %v200 = vld [vmem:[%s2 + $0x18] sm:$0xf]
    %v208 = vunpack.c.l.b16 %v194
    %v209 = vunpack.c.l.b16 %v195
    %v210 = vunpack.c.l.b16 %v196
    %v211 = vunpack.c.l.b16 %v197
    %v212 = vunpack.c.l.b16 %v198
    %v213 = vunpack.c.l.b16 %v199
    %v214 = vunpack.c.l.b16 %v200
    %v215 = vpack.c.b16 %v209, %v208
    %v216 = vpack.c.b16 %v211, %v210
    %v217 = vpack.c.b16 %v213, %v212
    %v218 = vpack.c.b16 %v214, %v214
    %223 = vmatprep.subr.bf16.mxu0 0
    %224 = vmatpush1.bf16.msra.mxu0 %v133
    %225 = vmatprep.subr.bf16.mxu0 0
    %226 = vmatpush1.bf16.msra.mxu0 %v132
    %227 = vmatprep.subr.bf16.mxu0 0
    %228 = vmatpush1.bf16.msra.mxu0 %v131
    %229 = vmatprep.subr.bf16.mxu0 0
    %230 = vmatpush1.bf16.msra.mxu0 %v130
    %231 = vmatprep.subr.bf16.mxu0 0
    %232 = vmatpush1.bf16.msra.mxu0 %v129
    %233 = vmatprep.subr.bf16.mxu0 0
    %234 = vmatpush1.bf16.msra.mxu0 %v128
    %235 = vmatprep.subr.bf16.mxu0 0
    %236 = vmatpush1.bf16.msra.mxu0 %v127
    %237 = vmatprep.subr.bf16.mxu0 0
    %238 = vmatpush1.bf16.msra.mxu0 %v126
    %239 = vmatprep.subr.bf16.mxu0 0
    %240 = vmatpush2.bf16.msra.mxu0 0
    %241 = vmatprep.subr.bf16.mxu0 0
    %242 = vmatpush2.bf16.msra.mxu0 0
    %243 = vmatprep.subr.bf16.mxu0 0
    %244 = vmatpush2.bf16.msra.mxu0 0
    %245 = vmatprep.subr.bf16.mxu0 0
    %246 = vmatpush2.bf16.msra.mxu0 0
    %247 = vmatprep.subr.bf16.mxu0 0
    %248 = vmatpush2.bf16.msra.mxu0 0
    %249 = vmatprep.subr.bf16.mxu0 0
    %250 = vmatpush2.bf16.msra.mxu0 0
    %251 = vmatprep.subr.bf16.mxu0 0
    %252 = vmatpush2.bf16.msra.mxu0 0
    %253 = vmatprep.subr.bf16.mxu0 0
    %254 = vmatpush2.bf16.msra.mxu0 0
    %255 = vmatprep.mubr.bf16.mxu0 0
    %256 = vmatmul.mubr.bf16.gmra.mxu0 %v215
    %v257 = vpop.f32.mrf.mxu0
    %v258 = vadd.f32 0.0, %v257
    %v259 = vpop.f32.mrf.mxu0
    %v260 = vpop.f32.mrf.mxu0
    %v261 = vadd.f32 0.0, %v260
    %v262 = vpop.f32.mrf.mxu0
    %263 = vmatprep.mubr.bf16.mxu0 0
    %264 = vmatmul.mubr.bf16.gmra.mxu0 %v216
    %v265 = vpop.f32.mrf.mxu0
    %v266 = vadd.f32 0.0, %v265
    %v267 = vpop.f32.mrf.mxu0
    %v268 = vpop.f32.mrf.mxu0
    %v269 = vadd.f32 0.0, %v268
    %v270 = vpop.f32.mrf.mxu0
    %271 = vmatprep.mubr.bf16.mxu0 0
    %272 = vmatmul.mubr.bf16.gmra.mxu0 %v217
    %v273 = vpop.f32.mrf.mxu0
    %v274 = vadd.f32 0.0, %v273
    %v275 = vpop.f32.mrf.mxu0
    %v276 = vpop.f32.mrf.mxu0
    %v277 = vadd.f32 0.0, %v276
    %v278 = vpop.f32.mrf.mxu0
    %279 = vmatprep.mubr.bf16.mxu0 0
    %280 = vmatmul.mubr.bf16.gmra.mxu0 %v218
    %v281 = vpop.f32.mrf.mxu0
    %v282 = vadd.f32 0.0, %v281
    %v283 = vpop.f32.mrf.mxu0
    %v284 = vpop.f32.mrf.mxu0
    %v285 = vpop.f32.mrf.mxu0
    %286 = vdwg.mxu0
    %v287 = vld [vmem:[#allocation2] sm:$0xf]
    %v288 = vld [vmem:[#allocation2 + $0x4] sm:$0xf]
    %v289 = vld [vmem:[#allocation2 + $0x8] sm:$0xf]
    %v290 = vld [vmem:[#allocation2 + $0xc] sm:$0xf]
    %v291 = vld [vmem:[#allocation2 + $0x10] sm:$0xf]
    %v292 = vld [vmem:[#allocation2 + $0x14] sm:$0xf]
    %v293 = vld [vmem:[#allocation2 + $0x18] sm:$0xf]
    %v301 = vunpack.c.l.b16 %v287
    %v302 = vunpack.c.l.b16 %v288
    %v303 = vunpack.c.l.b16 %v289
    %v304 = vunpack.c.l.b16 %v290
    %v305 = vunpack.c.l.b16 %v291
    %v306 = vunpack.c.l.b16 %v292
    %v307 = vunpack.c.l.b16 %v293
    %v308 = vpack.c.b16 %v302, %v301
    %v309 = vpack.c.b16 %v304, %v303
    %v310 = vpack.c.b16 %v306, %v305
    %v311 = vpack.c.b16 %v307, %v307
    %316 = vmatprep.subr.bf16.mxu0 0
    %317 = vmatpush1.bf16.msra.mxu0 %v193
    %318 = vmatprep.subr.bf16.mxu0 0
    %319 = vmatpush1.bf16.msra.mxu0 %v192
    %320 = vmatprep.subr.bf16.mxu0 0
    %321 = vmatpush1.bf16.msra.mxu0 %v191
    %322 = vmatprep.subr.bf16.mxu0 0
    %323 = vmatpush1.bf16.msra.mxu0 %v190
    %324 = vmatprep.subr.bf16.mxu0 0
    %325 = vmatpush1.bf16.msra.mxu0 %v189
    %326 = vmatprep.subr.bf16.mxu0 0
    %327 = vmatpush1.bf16.msra.mxu0 %v188
    %328 = vmatprep.subr.bf16.mxu0 0
    %329 = vmatpush1.bf16.msra.mxu0 %v187
    %330 = vmatprep.subr.bf16.mxu0 0
    %331 = vmatpush1.bf16.msra.mxu0 %v186
    %332 = vmatprep.subr.bf16.mxu0 0
    %333 = vmatpush2.bf16.msra.mxu0 0
    %334 = vmatprep.subr.bf16.mxu0 0
    %335 = vmatpush2.bf16.msra.mxu0 0
    %336 = vmatprep.subr.bf16.mxu0 0
    %337 = vmatpush2.bf16.msra.mxu0 0
    %338 = vmatprep.subr.bf16.mxu0 0
    %339 = vmatpush2.bf16.msra.mxu0 0
    %340 = vmatprep.subr.bf16.mxu0 0
    %341 = vmatpush2.bf16.msra.mxu0 0
    %342 = vmatprep.subr.bf16.mxu0 0
    %343 = vmatpush2.bf16.msra.mxu0 0
    %344 = vmatprep.subr.bf16.mxu0 0
    %345 = vmatpush2.bf16.msra.mxu0 0
    %346 = vmatprep.subr.bf16.mxu0 0
    %347 = vmatpush2.bf16.msra.mxu0 0
    %348 = vmatprep.mubr.bf16.mxu0 0
    %349 = vmatmul.mubr.bf16.gmra.mxu0 %v308
    %v350 = vpop.f32.mrf.mxu0
    %v351 = vadd.f32 0.0, %v350
    %v352 = vpop.f32.mrf.mxu0
    %v353 = vpop.f32.mrf.mxu0
    %v354 = vadd.f32 0.0, %v353
    %v355 = vpop.f32.mrf.mxu0
    %356 = vmatprep.mubr.bf16.mxu0 0
    %357 = vmatmul.mubr.bf16.gmra.mxu0 %v309
    %v358 = vpop.f32.mrf.mxu0
    %v359 = vadd.f32 0.0, %v358
    %v360 = vpop.f32.mrf.mxu0
    %v361 = vpop.f32.mrf.mxu0
    %v362 = vadd.f32 0.0, %v361
    %v363 = vpop.f32.mrf.mxu0
    %364 = vmatprep.mubr.bf16.mxu0 0
    %365 = vmatmul.mubr.bf16.gmra.mxu0 %v310
    %v366 = vpop.f32.mrf.mxu0
    %v367 = vadd.f32 0.0, %v366
    %v368 = vpop.f32.mrf.mxu0
    %v369 = vpop.f32.mrf.mxu0
    %v370 = vadd.f32 0.0, %v369
    %v371 = vpop.f32.mrf.mxu0
    %372 = vmatprep.mubr.bf16.mxu0 0
    %373 = vmatmul.mubr.bf16.gmra.mxu0 %v311
    %v374 = vpop.f32.mrf.mxu0
    %v375 = vadd.f32 0.0, %v374
    %v376 = vpop.f32.mrf.mxu0
    %v377 = vpop.f32.mrf.mxu0
    %v378 = vpop.f32.mrf.mxu0
    %379 = vdwg.mxu0
    %v380 = vmax.f32 %v274, 0.0
    %v381 = vmax.f32 %v277, 0.0
    %v382 = vmax.f32 %v367, 0.0
    %v383 = vmax.f32 %v370, 0.0
    %v384 = vmul.f32 %v258, %v351
    %v385 = vmul.f32 %v261, %v354
    %v386 = vmul.f32 %v266, %v359
    %v387 = vmul.f32 %v269, %v362
    %v388 = vadd.f32 %v384, %v385
    %v389 = vadd.f32 %v388, %v386
    %v390 = vadd.f32 %v389, %v387
    %v391 = vrot.slane %v390, 4
    %v392 = vadd.f32 %v390, %v391
    %v393 = vrot.slane %v392, 2
    %v394 = vadd.f32 %v392, %v393
    %v395 = vrot.slane %v394, 1
    %v396 = vadd.f32 %v394, %v395
    %v397 = vmul.f32 %v282, %v375
    %v398 = vmax.f32 %v397, 1e-16
    %v399 = vrsqrt.pop %v398
    %v400 = vmul.f32 %v396, %v399
    %s401 = sld [smem:[#allocation6]]
    %s402 = sld [smem:[#allocation6 + $0x1]]
    %v403 = vld [vmem:[%s4] sm:$0xff]
    %v404 = vld [vmem:[%s4 + $0x8] sm:$0xff]
    %406 = vset.pattern.permute.xlu0 0
    %407 = vperm.xlu0 %406, %v403
    %v408 = vpop.permute.xlu0 %407
    %411 = vset.pattern.permute.xlu0 0
    %412 = vperm.xlu0 %411, %v404
    %v413 = vpop.permute.xlu0 %412
    %v415 = vmul.f32 %v380, %v408
    %v416 = vmul.f32 %v381, %v413
    %v417 = vadd.f32 %v415, %v416
    %v418 = vrot.slane %v417, 4
    %v419 = vadd.f32 %v417, %v418
    %v420 = vrot.slane %v419, 2
    %v421 = vadd.f32 %v419, %v420
    %v422 = vrot.slane %v421, 1
    %v423 = vadd.f32 %v421, %v422
    %v424 = vld [vmem:[%s5] sm:$0xff]
    %v425 = vld [vmem:[%s5 + $0x8] sm:$0xff]
    %427 = vset.pattern.permute.xlu0 0
    %428 = vperm.xlu0 %427, %v424
    %v429 = vpop.permute.xlu0 %428
    %432 = vset.pattern.permute.xlu0 0
    %433 = vperm.xlu0 %432, %v425
    %v434 = vpop.permute.xlu0 %433
    %v436 = vmul.f32 %v382, %v429
    %v437 = vmul.f32 %v383, %v434
    %v438 = vadd.f32 %v436, %v437
    %v439 = vrot.slane %v438, 4
    %v440 = vadd.f32 %v438, %v439
    %v441 = vrot.slane %v440, 2
    %v442 = vadd.f32 %v440, %v441
    %v443 = vrot.slane %v442, 1
    %v444 = vadd.f32 %v442, %v443
    %v445 = vadd.f32 %v423, %v444
    %v446 = vstv %s401
    %v447 = vmul.f32 %v400, %v446
    %v448 = vadd.f32 %v445, %v447
    %v449 = vstv %s402
    %v450 = vadd.f32 %v448, %v449
    %v451 = vxor.u32 %v450, 2147483648
    %v452 = vmul.f32 %v451, 1.442695
    %v453 = vpow.pop %v452
    %v454 = vadd.f32 %v453, 1.0
    %v455 = vrcp.pop %v454
    %v456 = vmul.f32 1.0, %v455
    %v457 = vmul.f32 %v456, 5.0
    %v458 = vadd.f32 %v457, 0.25
    %459 = vst [vmem:[#allocation7] sm:$0x1] %v458
    // Predicated region
    $region38: #{tpu_custom_call.1} parent=1 // pred_check
      _
    $region39: #{tpu_custom_call.1} parent=1 // pred_check_branch
      %461 = sbr.rel (0) target = $region41
    $region40: #{tpu_custom_call.1} parent=1 // pred_region
      %s463 = ssub.s32 16, 16
      %464 = vsyncadd [#allocation4], %s463
      %s466 = sshll.u32 [#allocation7], 4
      %s467 = int_to_ptr.vmem [resolvable:$true] %s466
      %469 = dma.vmem_to_hbm [thread:$0]  %s467, 16, %s7, [#allocation4]
    $region41: #{tpu_custom_call.1} parent=1 // pred_fallthru
      _
    // Predicated region
    $region42: #{tpu_custom_call.1} parent=1 // pred_check
      _
    $region43: #{tpu_custom_call.1} parent=1 // pred_check_branch
      %471 = sbr.rel (0) target = $region45
    $region44: #{tpu_custom_call.1} parent=1 // pred_region
      %472 = dma.done [#allocation4], 16
    $region45: #{tpu_custom_call.1} parent=1 // pred_fallthru
      _
    %473 = vsyncpa [#allocation3], 1
    %474 = vsyncpa [#allocation4], 1
    %475 = vsyncpa [#allocation5], 1

</llo_original>
